<compile_context>
chip_gen: v7x
topology: tpu7x:2x2x1
jax: 0.10.0
libtpu: 0.0.40
codegen_flags: <defaults>
</compile_context>

<pallas_src>
import functools

import jax
import jax.numpy as jnp
from jax.experimental import pallas as pl
from jax.experimental.pallas import tpu as pltpu


def _round_up(x, m):
    return ((x + m - 1) // m) * m


def residual_se3_head_kernel(xt_ref,
                             w_in_ref, b_in_ref,
                             ln_w_ref, ln_b_ref, w_blk_ref, b_blk_ref,
                             w_out_ref, b_out_ref, o_ref, *, hidden_dim):
    """One batch tile per grid step. Weights are resident, single-buffered VMEM blocks."""
    eps = 1e-5
    n_blocks = ln_w_ref.shape[0]
    h_pad = ln_w_ref.shape[-1]
    inv_h = 1.0 / float(hidden_dim)
    needs_mask = hidden_dim != h_pad

    if needs_mask:
        # Mask of real (unpadded) hidden columns, used only for LayerNorm variance.
        col = jax.lax.broadcasted_iota(jnp.int32, (1, h_pad), 1)
        mask = (col < hidden_dim).astype(jnp.float32)

    # Fused input projection: cat([x_flat, t_emb]) @ W_in + b, single MXU pass.
    # bf16 operands, f32 MXU accumulation; bias added in f32.
    x = (jnp.dot(xt_ref[...].astype(jnp.bfloat16), w_in_ref[...],
                 preferred_element_type=jnp.float32)
         + b_in_ref[...])

    def block(x, ln_w, ln_b, w_b, b_b):
        # Unmasked mean is exact because padded hidden columns of x are exactly 0
        # (zero-padded weights/biases; residual preserves the invariant).
        mu = jnp.sum(x, axis=-1, keepdims=True) * inv_h
        c = x - mu
        if needs_mask:
            c = c * mask                        # applied once; feeds both var and h
        var = jnp.sum(c * c, axis=-1, keepdims=True) * inv_h
        h = c * jax.lax.rsqrt(var + eps)
        h = h * ln_w + ln_b                     # padded cols -> exactly 0
        # SiLU with a single EUP transcendental: sigmoid(h) = 0.5*tanh(0.5*h) + 0.5.
        # TODO(synk): on v6e/v7x this scale-shift + SiLU could run in bf16 (2x packed VPU/EUP);
        # kept f32 here for v5e compatibility and tight reference matching.
        h = h * (0.5 * jnp.tanh(0.5 * h) + 0.5)
        h = jnp.dot(h.astype(jnp.bfloat16), w_b,
                    preferred_element_type=jnp.float32) + b_b
        # TODO(synk): nn.Dropout is identity in eval mode; train-mode dropout not modeled.
        return x + h

    if n_blocks <= 4:
        # Short stacks: static unroll (LLO scheduler sees the whole thing).
        for i in range(n_blocks):
            x = block(x, ln_w_ref[i], ln_b_ref[i], w_blk_ref[i], b_blk_ref[i])
    else:
        # Deep stacks: fori_loop bounds vreg live ranges; resident refs indexed dynamically.
        # TODO(synk): for very large n_blocks*h_pad^2 (v7x 64 MiB VMEM), stream w_blk over a
        # second "arbitrary" grid axis instead of keeping all block weights resident.
        def body(i, xc):
            return block(xc, ln_w_ref[i], ln_b_ref[i], w_blk_ref[i], b_blk_ref[i])
        x = jax.lax.fori_loop(0, n_blocks, body, x)

    # Fused out_rot / out_trans heads: (TB, H_pad) @ (H_pad, 6) + (1, 6).
    out = jnp.dot(x.astype(jnp.bfloat16), w_out_ref[...],
                  preferred_element_type=jnp.float32) + b_out_ref[...]
    o_ref[...] = out.astype(o_ref.dtype)


def make_params(key, d_model, hidden_dim, n_blocks, dtype=jnp.float32):
    """Logical (unpadded, f32) parameters, laid out as x @ W + b."""
    ks = jax.random.split(key, 8)
    in_dim = 12 + d_model
    scale_in = 1.0 / jnp.sqrt(in_dim).astype(dtype)
    scale_h = 1.0 / jnp.sqrt(hidden_dim).astype(dtype)
    return dict(
        w_in=jax.random.normal(ks[0], (in_dim, hidden_dim), dtype) * scale_in,
        b_in=jax.random.normal(ks[1], (1, hidden_dim), dtype) * 0.01,
        ln_w=jnp.ones((n_blocks, 1, hidden_dim), dtype)
             + 0.05 * jax.random.normal(ks[2], (n_blocks, 1, hidden_dim), dtype),
        ln_b=0.05 * jax.random.normal(ks[3], (n_blocks, 1, hidden_dim), dtype),
        w_blk=jax.random.normal(ks[4], (n_blocks, hidden_dim, hidden_dim), dtype) * scale_h,
        b_blk=jax.random.normal(ks[5], (n_blocks, 1, hidden_dim), dtype) * 0.01,
        # out_rot (H,3) and out_trans (H,3) concatenated along the output axis -> (H,6)
        w_out=jax.random.normal(ks[6], (hidden_dim, 6), dtype) * scale_h,
        b_out=jax.random.normal(ks[7], (1, 6), dtype) * 0.01,
    )


def prepare_kernel_params(params, hidden_dim):
    """Zero-pad hidden dim to a multiple of 128, cast matmul weights to bf16."""
    h_pad = _round_up(hidden_dim, 128)
    ph = h_pad - hidden_dim

    def padh(a, axes):
        pads = [(0, 0)] * a.ndim
        for ax in axes:
            pads[ax] = (0, ph)
        return jnp.pad(a, pads)

    return dict(
        w_in=padh(params["w_in"], (1,)).astype(jnp.bfloat16),
        b_in=padh(params["b_in"], (1,)).astype(jnp.float32),
        ln_w=padh(params["ln_w"], (2,)).astype(jnp.float32),
        ln_b=padh(params["ln_b"], (2,)).astype(jnp.float32),
        w_blk=padh(params["w_blk"], (1, 2)).astype(jnp.bfloat16),
        b_blk=padh(params["b_blk"], (2,)).astype(jnp.float32),
        w_out=padh(params["w_out"], (0,)).astype(jnp.bfloat16),
        b_out=params["b_out"].astype(jnp.float32),
    )


def _resident(shape):
    """Weight loaded once, reused every grid step; single pipeline buffer (no waste)."""
    nd = len(shape)
    idx = lambda i, _nd=nd: (0,) * _nd
    try:
        return pl.BlockSpec(shape, idx, pipeline_mode=pl.Buffered(1))
    except (AttributeError, TypeError):
        # Older JAX without pipeline_mode/Buffered: fall back to default double-buffering.
        return pl.BlockSpec(shape, idx)


def residual_se3_head(x_flat, t_emb, kp, *, hidden_dim, tile_b=512):
    B = x_flat.shape[0]
    in_dim = x_flat.shape[1] + t_emb.shape[1]
    h_pad = kp["b_in"].shape[-1]
    n_blocks = kp["w_blk"].shape[0]

    # Fused input for a single prologue matmul (replaces the K=12 / K=d_model split).
    xt = jnp.concatenate([x_flat, t_emb], axis=1)

    # Batch tile: big to amortize ~0.35us per-step overhead; when B allows, force >=2
    # grid steps so megacore sharding (v7x: 2 TCs) of the "parallel" axis is possible.
    if B <= 8:
        tb = B
    elif B <= 2 * tile_b:
        tb = min(B, max(8, _round_up(pl.cdiv(B, 2), 8)))
    else:
        tb = tile_b
    grid = (pl.cdiv(B, tb),)

    weight_names = ("w_in", "b_in", "ln_w", "ln_b", "w_blk", "b_blk", "w_out", "b_out")
    weight_args = [kp[k] for k in weight_names]

    in_specs = [pl.BlockSpec((tb, in_dim), lambda i: (i, 0))]
    in_specs += [_resident(a.shape) for a in weight_args]
    # Output last dim (6) is the full array dim; narrow masked stores are not the
    # bottleneck at these sizes (pad to lane-dense width only if profiling says so).
    out_spec = pl.BlockSpec((tb, 6), lambda i: (i, 0))

    flops = 2 * B * (in_dim * h_pad + n_blocks * h_pad * h_pad + h_pad * 6)
    transcendentals = B * n_blocks * (h_pad + 1)          # tanh + rsqrt per block
    weight_bytes = sum(int(a.size) * a.dtype.itemsize for a in weight_args)
    bytes_accessed = (int(xt.size) * xt.dtype.itemsize
                      + B * 6 * x_flat.dtype.itemsize
                      + weight_bytes)

    # VMEM budget: weights counted once (single-buffered), I/O tiles double-buffered,
    # f32 activation temporaries, plus headroom; capped at 48 MiB (safe on v7x's 64 MiB).
    tile_io_bytes = 2 * tb * (in_dim + 6) * 4
    act_bytes = 8 * tb * h_pad * 4
    vmem_limit = int(min(48 * 2 ** 20,
                         max(8 * 2 ** 20,
                             weight_bytes + tile_io_bytes + act_bytes + (4 << 20))))

    kernel = functools.partial(residual_se3_head_kernel, hidden_dim=hidden_dim)
    return pl.pallas_call(
        kernel,
        out_shape=jax.ShapeDtypeStruct((B, 6), x_flat.dtype),
        grid=grid,
        in_specs=in_specs,
        out_specs=out_spec,
        compiler_params=pltpu.CompilerParams(
            dimension_semantics=("parallel",),
            vmem_limit_bytes=vmem_limit),
        cost_estimate=pl.CostEstimate(
            flops=flops,
            transcendentals=transcendentals,
            bytes_accessed=bytes_accessed),
    )(xt, *weight_args)


def residual_se3_head_ref(x_flat, t_emb, params):
    """Pure-JAX reference mirroring the kernel math (bf16 MXU operands, f32 accumulation)."""
    bf = jnp.bfloat16
    eps = 1e-5
    xt = jnp.concatenate([x_flat, t_emb], axis=1)
    x = (jnp.dot(xt.astype(bf), params["w_in"].astype(bf),
                 preferred_element_type=jnp.float32) + params["b_in"])
    for i in range(params["ln_w"].shape[0]):
        mu = jnp.mean(x, axis=-1, keepdims=True)
        var = jnp.mean((x - mu) ** 2, axis=-1, keepdims=True)
        h = (x - mu) * jax.lax.rsqrt(var + eps)
        h = h * params["ln_w"][i] + params["ln_b"][i]
        h = h * jax.nn.sigmoid(h)
        h = jnp.dot(h.astype(bf), params["w_blk"][i].astype(bf),
                    preferred_element_type=jnp.float32) + params["b_blk"][i]
        x = x + h
    return (jnp.dot(x.astype(bf), params["w_out"].astype(bf),
                    preferred_element_type=jnp.float32) + params["b_out"])


def _run_case(key, B, d_model, hidden_dim, n_blocks):
    k_x, k_t, k_p = jax.random.split(key, 3)
    x_flat = jax.random.normal(k_x, (B, 12), jnp.float32)
    t_emb = jax.random.normal(k_t, (B, d_model), jnp.float32)

    params = make_params(k_p, d_model, hidden_dim, n_blocks)
    kp = prepare_kernel_params(params, hidden_dim)

    out = residual_se3_head(x_flat, t_emb, kp, hidden_dim=hidden_dim)
    out = jax.block_until_ready(out)

    ref = residual_se3_head_ref(x_flat, t_emb, params)
    assert out.shape == (B, 6)
    assert jnp.allclose(out, ref, atol=2e-3, rtol=2e-3), "mismatch vs JAX reference"


if __name__ == "__main__":
    key = jax.random.PRNGKey(0)
    k1, k2 = jax.random.split(key)
    # Small config matching the module spec: static-unrolled blocks, single grid step.
    _run_case(k1, B=8, d_model=32, hidden_dim=32, n_blocks=2)
    # Deeper config: fori_loop block path, 2 grid steps, partial last batch tile.
    _run_case(k2, B=20, d_model=32, hidden_dim=32, n_blocks=6)
    print("KERNEL_OK")
</pallas_src>

<mosaic_0001>
module attributes {stable_mosaic.version = 11 : i64} {
  func.func @residual_se3_head_kernel(%arg0: i32, %arg1: memref<8x44xf32, #tpu.memory_space<vmem>>, %arg2: memref<44x128xbf16, #tpu.memory_space<vmem>>, %arg3: memref<1x128xf32, #tpu.memory_space<vmem>>, %arg4: memref<2x1x128xf32, #tpu.memory_space<vmem>>, %arg5: memref<2x1x128xf32, #tpu.memory_space<vmem>>, %arg6: memref<2x128x128xbf16, #tpu.memory_space<vmem>>, %arg7: memref<2x1x128xf32, #tpu.memory_space<vmem>>, %arg8: memref<128x6xbf16, #tpu.memory_space<vmem>>, %arg9: memref<1x6xf32, #tpu.memory_space<vmem>>, %arg10: memref<8x6xf32, #tpu.memory_space<vmem>>) attributes {dimension_semantics = [#tpu.dimension_semantics<parallel>], iteration_bounds = array<i64: 1>, scalar_prefetch = 0 : i64, scratch_operands = 0 : i64, tpu.core_type = #tpu.core_type<tc>, window_params = [{transform_indices = @transform_0, window_bounds = array<i64: 8, 44>}, {pipeline_mode = #tpu.pipeline_mode<synchronous>, transform_indices = @transform_1, window_bounds = array<i64: 44, 128>}, {pipeline_mode = #tpu.pipeline_mode<synchronous>, transform_indices = @transform_2, window_bounds = array<i64: 1, 128>}, {pipeline_mode = #tpu.pipeline_mode<synchronous>, transform_indices = @transform_3, window_bounds = array<i64: 2, 1, 128>}, {pipeline_mode = #tpu.pipeline_mode<synchronous>, transform_indices = @transform_4, window_bounds = array<i64: 2, 1, 128>}, {pipeline_mode = #tpu.pipeline_mode<synchronous>, transform_indices = @transform_5, window_bounds = array<i64: 2, 128, 128>}, {pipeline_mode = #tpu.pipeline_mode<synchronous>, transform_indices = @transform_6, window_bounds = array<i64: 2, 1, 128>}, {pipeline_mode = #tpu.pipeline_mode<synchronous>, transform_indices = @transform_7, window_bounds = array<i64: 128, 6>}, {pipeline_mode = #tpu.pipeline_mode<synchronous>, transform_indices = @transform_8, window_bounds = array<i64: 1, 6>}, {transform_indices = @transform_9, window_bounds = array<i64: 8, 6>}]} {
    %0 = tpu.iota {dimensions = array<i32: 1>} : vector<1x128xi32>
    %c32_i32 = arith.constant 32 : i32
    %1 = vector.broadcast %c32_i32 : i32 to vector<1x128xi32>
    %2 = arith.cmpi slt, %0, %1 : vector<1x128xi32>
    %3 = arith.extui %2 : vector<1x128xi1> to vector<1x128xi32>
    %4 = arith.sitofp %3 : vector<1x128xi32> to vector<1x128xf32>
    %c0 = arith.constant 0 : index
    %c0_0 = arith.constant 0 : index
    %5 = vector.load %arg1[%c0, %c0_0] : memref<8x44xf32, #tpu.memory_space<vmem>>, vector<8x44xf32>
    %6 = arith.truncf %5 : vector<8x44xf32> to vector<8x44xbf16>
    %c0_1 = arith.constant 0 : index
    %c0_2 = arith.constant 0 : index
    %7 = vector.load %arg2[%c0_1, %c0_2] : memref<44x128xbf16, #tpu.memory_space<vmem>>, vector<44x128xbf16>
    %cst = arith.constant dense<0.000000e+00> : vector<8x128xf32>
    %8 = tpu.matmul %6, %7, %cst {dimension_numbers = #tpu.dot_dimension_numbers<[1], [0], [0], [1], [0, 0, 1, 1], [], []>} : vector<8x44xbf16>, vector<44x128xbf16>, vector<8x128xf32> -> vector<8x128xf32>
    %c0_3 = arith.constant 0 : index
    %c0_4 = arith.constant 0 : index
    %9 = vector.load %arg3[%c0_3, %c0_4] : memref<1x128xf32, #tpu.memory_space<vmem>>, vector<1x128xf32>
    %10 = vector.broadcast %9 : vector<1x128xf32> to vector<8x128xf32>
    %11 = arith.addf %8, %10 : vector<8x128xf32>
    %c0_5 = arith.constant 0 : index
    %c0_6 = arith.constant 0 : index
    %c0_7 = arith.constant 0 : index
    %12 = vector.load %arg4[%c0_5, %c0_6, %c0_7] : memref<2x1x128xf32, #tpu.memory_space<vmem>>, vector<1x1x128xf32>
    %13 = vector.shape_cast %12 : vector<1x1x128xf32> to vector<1x128xf32>
    %c0_8 = arith.constant 0 : index
    %c0_9 = arith.constant 0 : index
    %c0_10 = arith.constant 0 : index
    %14 = vector.load %arg5[%c0_8, %c0_9, %c0_10] : memref<2x1x128xf32, #tpu.memory_space<vmem>>, vector<1x1x128xf32>
    %15 = vector.shape_cast %14 : vector<1x1x128xf32> to vector<1x128xf32>
    %c0_11 = arith.constant 0 : index
    %c0_12 = arith.constant 0 : index
    %c0_13 = arith.constant 0 : index
    %16 = vector.load %arg6[%c0_11, %c0_12, %c0_13] : memref<2x128x128xbf16, #tpu.memory_space<vmem>>, vector<1x128x128xbf16>
    %17 = vector.shape_cast %16 : vector<1x128x128xbf16> to vector<128x128xbf16>
    %c0_14 = arith.constant 0 : index
    %c0_15 = arith.constant 0 : index
    %c0_16 = arith.constant 0 : index
    %18 = vector.load %arg7[%c0_14, %c0_15, %c0_16] : memref<2x1x128xf32, #tpu.memory_space<vmem>>, vector<1x1x128xf32>
    %19 = vector.shape_cast %18 : vector<1x1x128xf32> to vector<1x128xf32>
    %cst_17 = arith.constant dense<0.000000e+00> : vector<8xf32>
    %20 = vector.multi_reduction <add>, %11, %cst_17 [1] : vector<8x128xf32> to vector<8xf32>
    %21 = vector.shape_cast %20 : vector<8xf32> to vector<8x1xf32>
    %cst_18 = arith.constant 3.125000e-02 : f32
    %22 = vector.broadcast %cst_18 : f32 to vector<8x1xf32>
    %23 = arith.mulf %21, %22 : vector<8x1xf32>
    %24 = vector.broadcast %23 : vector<8x1xf32> to vector<8x128xf32>
    %25 = arith.subf %11, %24 : vector<8x128xf32>
    %26 = vector.broadcast %4 : vector<1x128xf32> to vector<8x128xf32>
    %27 = arith.mulf %25, %26 : vector<8x128xf32>
    %28 = arith.mulf %27, %27 : vector<8x128xf32>
    %cst_19 = arith.constant dense<0.000000e+00> : vector<8xf32>
    %29 = vector.multi_reduction <add>, %28, %cst_19 [1] : vector<8x128xf32> to vector<8xf32>
    %30 = vector.shape_cast %29 : vector<8xf32> to vector<8x1xf32>
    %cst_20 = arith.constant 3.125000e-02 : f32
    %31 = vector.broadcast %cst_20 : f32 to vector<8x1xf32>
    %32 = arith.mulf %30, %31 : vector<8x1xf32>
    %cst_21 = arith.constant 9.99999974E-6 : f32
    %33 = vector.broadcast %cst_21 : f32 to vector<8x1xf32>
    %34 = arith.addf %32, %33 : vector<8x1xf32>
    %35 = math.rsqrt %34 : vector<8x1xf32>
    %36 = vector.broadcast %35 : vector<8x1xf32> to vector<8x128xf32>
    %37 = arith.mulf %27, %36 : vector<8x128xf32>
    %38 = vector.broadcast %13 : vector<1x128xf32> to vector<8x128xf32>
    %39 = arith.mulf %37, %38 : vector<8x128xf32>
    %40 = vector.broadcast %15 : vector<1x128xf32> to vector<8x128xf32>
    %41 = arith.addf %39, %40 : vector<8x128xf32>
    %cst_22 = arith.constant 5.000000e-01 : f32
    %42 = vector.broadcast %cst_22 : f32 to vector<8x128xf32>
    %43 = arith.mulf %42, %41 : vector<8x128xf32>
    %44 = math.tanh %43 : vector<8x128xf32>
    %cst_23 = arith.constant 5.000000e-01 : f32
    %45 = vector.broadcast %cst_23 : f32 to vector<8x128xf32>
    %46 = arith.mulf %45, %44 : vector<8x128xf32>
    %cst_24 = arith.constant 5.000000e-01 : f32
    %47 = vector.broadcast %cst_24 : f32 to vector<8x128xf32>
    %48 = arith.addf %46, %47 : vector<8x128xf32>
    %49 = arith.mulf %41, %48 : vector<8x128xf32>
    %50 = arith.truncf %49 : vector<8x128xf32> to vector<8x128xbf16>
    %cst_25 = arith.constant dense<0.000000e+00> : vector<8x128xf32>
    %51 = tpu.matmul %50, %17, %cst_25 {dimension_numbers = #tpu.dot_dimension_numbers<[1], [0], [0], [1], [0, 0, 1, 1], [], []>} : vector<8x128xbf16>, vector<128x128xbf16>, vector<8x128xf32> -> vector<8x128xf32>
    %52 = vector.broadcast %19 : vector<1x128xf32> to vector<8x128xf32>
    %53 = arith.addf %51, %52 : vector<8x128xf32>
    %54 = arith.addf %11, %53 : vector<8x128xf32>
    %c1 = arith.constant 1 : index
    %c0_26 = arith.constant 0 : index
    %c0_27 = arith.constant 0 : index
    %55 = vector.load %arg4[%c1, %c0_26, %c0_27] : memref<2x1x128xf32, #tpu.memory_space<vmem>>, vector<1x1x128xf32>
    %56 = vector.shape_cast %55 : vector<1x1x128xf32> to vector<1x128xf32>
    %c1_28 = arith.constant 1 : index
    %c0_29 = arith.constant 0 : index
    %c0_30 = arith.constant 0 : index
    %57 = vector.load %arg5[%c1_28, %c0_29, %c0_30] : memref<2x1x128xf32, #tpu.memory_space<vmem>>, vector<1x1x128xf32>
    %58 = vector.shape_cast %57 : vector<1x1x128xf32> to vector<1x128xf32>
    %c1_31 = arith.constant 1 : index
    %c0_32 = arith.constant 0 : index
    %c0_33 = arith.constant 0 : index
    %59 = vector.load %arg6[%c1_31, %c0_32, %c0_33] : memref<2x128x128xbf16, #tpu.memory_space<vmem>>, vector<1x128x128xbf16>
    %60 = vector.shape_cast %59 : vector<1x128x128xbf16> to vector<128x128xbf16>
    %c1_34 = arith.constant 1 : index
    %c0_35 = arith.constant 0 : index
    %c0_36 = arith.constant 0 : index
    %61 = vector.load %arg7[%c1_34, %c0_35, %c0_36] : memref<2x1x128xf32, #tpu.memory_space<vmem>>, vector<1x1x128xf32>
    %62 = vector.shape_cast %61 : vector<1x1x128xf32> to vector<1x128xf32>
    %cst_37 = arith.constant dense<0.000000e+00> : vector<8xf32>
    %63 = vector.multi_reduction <add>, %54, %cst_37 [1] : vector<8x128xf32> to vector<8xf32>
    %64 = vector.shape_cast %63 : vector<8xf32> to vector<8x1xf32>
    %cst_38 = arith.constant 3.125000e-02 : f32
    %65 = vector.broadcast %cst_38 : f32 to vector<8x1xf32>
    %66 = arith.mulf %64, %65 : vector<8x1xf32>
    %67 = vector.broadcast %66 : vector<8x1xf32> to vector<8x128xf32>
    %68 = arith.subf %54, %67 : vector<8x128xf32>
    %69 = vector.broadcast %4 : vector<1x128xf32> to vector<8x128xf32>
    %70 = arith.mulf %68, %69 : vector<8x128xf32>
    %71 = arith.mulf %70, %70 : vector<8x128xf32>
    %cst_39 = arith.constant dense<0.000000e+00> : vector<8xf32>
    %72 = vector.multi_reduction <add>, %71, %cst_39 [1] : vector<8x128xf32> to vector<8xf32>
    %73 = vector.shape_cast %72 : vector<8xf32> to vector<8x1xf32>
    %cst_40 = arith.constant 3.125000e-02 : f32
    %74 = vector.broadcast %cst_40 : f32 to vector<8x1xf32>
    %75 = arith.mulf %73, %74 : vector<8x1xf32>
    %cst_41 = arith.constant 9.99999974E-6 : f32
    %76 = vector.broadcast %cst_41 : f32 to vector<8x1xf32>
    %77 = arith.addf %75, %76 : vector<8x1xf32>
    %78 = math.rsqrt %77 : vector<8x1xf32>
    %79 = vector.broadcast %78 : vector<8x1xf32> to vector<8x128xf32>
    %80 = arith.mulf %70, %79 : vector<8x128xf32>
    %81 = vector.broadcast %56 : vector<1x128xf32> to vector<8x128xf32>
    %82 = arith.mulf %80, %81 : vector<8x128xf32>
    %83 = vector.broadcast %58 : vector<1x128xf32> to vector<8x128xf32>
    %84 = arith.addf %82, %83 : vector<8x128xf32>
    %cst_42 = arith.constant 5.000000e-01 : f32
    %85 = vector.broadcast %cst_42 : f32 to vector<8x128xf32>
    %86 = arith.mulf %85, %84 : vector<8x128xf32>
    %87 = math.tanh %86 : vector<8x128xf32>
    %cst_43 = arith.constant 5.000000e-01 : f32
    %88 = vector.broadcast %cst_43 : f32 to vector<8x128xf32>
    %89 = arith.mulf %88, %87 : vector<8x128xf32>
    %cst_44 = arith.constant 5.000000e-01 : f32
    %90 = vector.broadcast %cst_44 : f32 to vector<8x128xf32>
    %91 = arith.addf %89, %90 : vector<8x128xf32>
    %92 = arith.mulf %84, %91 : vector<8x128xf32>
    %93 = arith.truncf %92 : vector<8x128xf32> to vector<8x128xbf16>
    %cst_45 = arith.constant dense<0.000000e+00> : vector<8x128xf32>
    %94 = tpu.matmul %93, %60, %cst_45 {dimension_numbers = #tpu.dot_dimension_numbers<[1], [0], [0], [1], [0, 0, 1, 1], [], []>} : vector<8x128xbf16>, vector<128x128xbf16>, vector<8x128xf32> -> vector<8x128xf32>
    %95 = vector.broadcast %62 : vector<1x128xf32> to vector<8x128xf32>
    %96 = arith.addf %94, %95 : vector<8x128xf32>
    %97 = arith.addf %54, %96 : vector<8x128xf32>
    %98 = arith.truncf %97 : vector<8x128xf32> to vector<8x128xbf16>
    %c0_46 = arith.constant 0 : index
    %c0_47 = arith.constant 0 : index
    %99 = vector.load %arg8[%c0_46, %c0_47] : memref<128x6xbf16, #tpu.memory_space<vmem>>, vector<128x6xbf16>
    %cst_48 = arith.constant dense<0.000000e+00> : vector<8x6xf32>
    %100 = tpu.matmul %98, %99, %cst_48 {dimension_numbers = #tpu.dot_dimension_numbers<[1], [0], [0], [1], [0, 0, 1, 1], [], []>} : vector<8x128xbf16>, vector<128x6xbf16>, vector<8x6xf32> -> vector<8x6xf32>
    %c0_49 = arith.constant 0 : index
    %c0_50 = arith.constant 0 : index
    %101 = vector.load %arg9[%c0_49, %c0_50] : memref<1x6xf32, #tpu.memory_space<vmem>>, vector<1x6xf32>
    %102 = vector.broadcast %101 : vector<1x6xf32> to vector<8x6xf32>
    %103 = arith.addf %100, %102 : vector<8x6xf32>
    %c0_51 = arith.constant 0 : index
    %c0_52 = arith.constant 0 : index
    %104 = vector.load %arg10[%c0_51, %c0_52] : memref<8x6xf32, #tpu.memory_space<vmem>>, vector<8x6xf32>
    tpu.vector_store %arg10[%c0_51, %c0_52], %103 {strides = array<i32>} : memref<8x6xf32, #tpu.memory_space<vmem>>, vector<8x6xf32>,
    return
  }
  func.func @transform_0(%arg0: i32) -> (i32, i32) {
    %c0_i32 = arith.constant 0 : i32
    %c0_i32_0 = arith.constant 0 : i32
    return %arg0, %c0_i32 : i32, i32
  }
  func.func @transform_1(%arg0: i32) -> (i32, i32) {
    %c0_i32 = arith.constant 0 : i32
    %c0_i32_0 = arith.constant 0 : i32
    %c0_i32_1 = arith.constant 0 : i32
    return %c0_i32, %c0_i32_0 : i32, i32
  }
  func.func @transform_2(%arg0: i32) -> (i32, i32) {
    %c0_i32 = arith.constant 0 : i32
    %c0_i32_0 = arith.constant 0 : i32
    %c0_i32_1 = arith.constant 0 : i32
    return %c0_i32, %c0_i32_0 : i32, i32
  }
  func.func @transform_3(%arg0: i32) -> (i32, i32, i32) {
    %c0_i32 = arith.constant 0 : i32
    %c0_i32_0 = arith.constant 0 : i32
    %c0_i32_1 = arith.constant 0 : i32
    %c0_i32_2 = arith.constant 0 : i32
    return %c0_i32, %c0_i32_0, %c0_i32_1 : i32, i32, i32
  }
  func.func @transform_4(%arg0: i32) -> (i32, i32, i32) {
    %c0_i32 = arith.constant 0 : i32
    %c0_i32_0 = arith.constant 0 : i32
    %c0_i32_1 = arith.constant 0 : i32
    %c0_i32_2 = arith.constant 0 : i32
    return %c0_i32, %c0_i32_0, %c0_i32_1 : i32, i32, i32
  }
  func.func @transform_5(%arg0: i32) -> (i32, i32, i32) {
    %c0_i32 = arith.constant 0 : i32
    %c0_i32_0 = arith.constant 0 : i32
    %c0_i32_1 = arith.constant 0 : i32
    %c0_i32_2 = arith.constant 0 : i32
    return %c0_i32, %c0_i32_0, %c0_i32_1 : i32, i32, i32
  }
  func.func @transform_6(%arg0: i32) -> (i32, i32, i32) {
    %c0_i32 = arith.constant 0 : i32
    %c0_i32_0 = arith.constant 0 : i32
    %c0_i32_1 = arith.constant 0 : i32
    %c0_i32_2 = arith.constant 0 : i32
    return %c0_i32, %c0_i32_0, %c0_i32_1 : i32, i32, i32
  }
  func.func @transform_7(%arg0: i32) -> (i32, i32) {
    %c0_i32 = arith.constant 0 : i32
    %c0_i32_0 = arith.constant 0 : i32
    %c0_i32_1 = arith.constant 0 : i32
    return %c0_i32, %c0_i32_0 : i32, i32
  }
  func.func @transform_8(%arg0: i32) -> (i32, i32) {
    %c0_i32 = arith.constant 0 : i32
    %c0_i32_0 = arith.constant 0 : i32
    %c0_i32_1 = arith.constant 0 : i32
    return %c0_i32, %c0_i32_0 : i32, i32
  }
  func.func @transform_9(%arg0: i32) -> (i32, i32) {
    %c0_i32 = arith.constant 0 : i32
    %c0_i32_0 = arith.constant 0 : i32
    return %arg0, %c0_i32 : i32, i32
  }
}

</mosaic_0001>

<llo_original>
// kernel: tpu_custom_call.1
$region0: #{tpu_custom_call.1}
  #allocation0 [shape = 'u32[]', space=smem, size = 0x4, offset = 0x4, fixed_abs, tag = 'smem constant byte address 0x4 - core index']
  #allocation1 [shape = 'u32[144,128]{1,0:T(1,128)}', space=vmem, size = 0x12000, scoped, tag = 'internal scratch']
  %s0 = inlined_call_operand.vmem [shape: f32[8,44], index: 0, kind: input, shape index: {}]
  %s1 = inlined_call_operand.vmem [shape: bf16[44,128], index: 1, kind: input, shape index: {}]
  %s2 = inlined_call_operand.vmem [shape: f32[1,128], index: 2, kind: input, shape index: {}]
  %s3 = inlined_call_operand.vmem [shape: f32[2,1,128], index: 3, kind: input, shape index: {}]
  %s4 = inlined_call_operand.vmem [shape: f32[2,1,128], index: 4, kind: input, shape index: {}]
  %s5 = inlined_call_operand.hbm [shape: bf16[2,128,128], index: 5, kind: input, shape index: {}]
  %s6 = inlined_call_operand.vmem [shape: f32[2,1,128], index: 6, kind: input, shape index: {}]
  %s7 = inlined_call_operand.vmem [shape: bf16[128,6], index: 7, kind: input, shape index: {}]
  %s8 = inlined_call_operand.vmem [shape: f32[1,6], index: 8, kind: input, shape index: {}]
  %s9 = inlined_call_operand.hbm [shape: f32[8,6], index: 9, kind: output, shape index: {}]
  %s10 = sld [smem:[#allocation0]]
  $region50: #{tpu_custom_call.1} parent=0
    _
  %s12 = ssub.s32 1, %s10
  %s13 = scalar_select 0, %s12, %s10
  $region1: #{tpu_custom_call.1} parent=0
    #allocation2 [shape = 'u8[65536]{0}', space=vmem, size = 0x10000, scoped, tag = 'input window, operand 5, single buffered']
    #allocation3 [shape = 's32[1]{0}', space=sflag, size = 0x4, scoped, tag = 'scoped memory for tpu_custom_call.1']
    #allocation4 [shape = 's32[1]{0}', space=sflag, size = 0x4, scoped, tag = 'scoped memory for tpu_custom_call.1']
    #allocation5 [shape = 'u8[4096]{0}', space=vmem, size = 0x1000, scoped, tag = 'output window, operand 0, single buffered']
    %14 = vsyncpa [#allocation3], 0
    %15 = vsyncpa [#allocation4], 0
    // Predicated region
    $region2: #{tpu_custom_call.1} parent=1 // pred_check
      _
    $region3: #{tpu_custom_call.1} parent=1 // pred_check_branch
      %17 = sbr.rel (0) target = $region5
    $region4: #{tpu_custom_call.1} parent=1 // pred_region
      _
    $region5: #{tpu_custom_call.1} parent=1 // pred_fallthru
      _
    // Predicated region
    $region6: #{tpu_custom_call.1} parent=1 // pred_check
      _
    $region7: #{tpu_custom_call.1} parent=1 // pred_check_branch
      %19 = sbr.rel (0) target = $region9
    $region8: #{tpu_custom_call.1} parent=1 // pred_region
      _
    $region9: #{tpu_custom_call.1} parent=1 // pred_fallthru
      _
    // Predicated region
    $region10: #{tpu_custom_call.1} parent=1 // pred_check
      _
    $region11: #{tpu_custom_call.1} parent=1 // pred_check_branch
      %21 = sbr.rel (0) target = $region13
    $region12: #{tpu_custom_call.1} parent=1 // pred_region
      _
    $region13: #{tpu_custom_call.1} parent=1 // pred_fallthru
      _
    // Predicated region
    $region14: #{tpu_custom_call.1} parent=1 // pred_check
      _
    $region15: #{tpu_custom_call.1} parent=1 // pred_check_branch
      %23 = sbr.rel (0) target = $region17
    $region16: #{tpu_custom_call.1} parent=1 // pred_region
      _
    $region17: #{tpu_custom_call.1} parent=1 // pred_fallthru
      _
    // Predicated region
    $region18: #{tpu_custom_call.1} parent=1 // pred_check
      _
    $region19: #{tpu_custom_call.1} parent=1 // pred_check_branch
      %25 = sbr.rel (0) target = $region21
    $region20: #{tpu_custom_call.1} parent=1 // pred_region
      _
    $region21: #{tpu_custom_call.1} parent=1 // pred_fallthru
      _
    // Predicated region
    $region22: #{tpu_custom_call.1} parent=1 // pred_check
      _
    $region23: #{tpu_custom_call.1} parent=1 // pred_check_branch
      %27 = sbr.rel (0) target = $region25
    $region24: #{tpu_custom_call.1} parent=1 // pred_region
      %s29 = ssub.s32 2048, 2048
      %30 = vsyncadd [#allocation3], %s29
      %s31 = sshll.u32 [#allocation2], 4
      %s32 = int_to_ptr.vmem [resolvable:$true] %s31
      %37 = dma.hbm_to_vmem [thread:$0]  %s5, 2048, %s32, [#allocation3], 64, 64, 4
    $region25: #{tpu_custom_call.1} parent=1 // pred_fallthru
      _
    // Predicated region
    $region26: #{tpu_custom_call.1} parent=1 // pred_check
      _
    $region27: #{tpu_custom_call.1} parent=1 // pred_check_branch
      %39 = sbr.rel (0) target = $region29
    $region28: #{tpu_custom_call.1} parent=1 // pred_region
      _
    $region29: #{tpu_custom_call.1} parent=1 // pred_fallthru
      _
    // Predicated region
    $region30: #{tpu_custom_call.1} parent=1 // pred_check
      _
    $region31: #{tpu_custom_call.1} parent=1 // pred_check_branch
      %41 = sbr.rel (0) target = $region33
    $region32: #{tpu_custom_call.1} parent=1 // pred_region
      _
    $region33: #{tpu_custom_call.1} parent=1 // pred_fallthru
      _
    // Predicated region
    $region34: #{tpu_custom_call.1} parent=1 // pred_check
      _
    $region35: #{tpu_custom_call.1} parent=1 // pred_check_branch
      %43 = sbr.rel (0) target = $region37
    $region36: #{tpu_custom_call.1} parent=1 // pred_region
      _
    $region37: #{tpu_custom_call.1} parent=1 // pred_fallthru
      _
    // Predicated region
    $region38: #{tpu_custom_call.1} parent=1 // pred_check
      _
    $region39: #{tpu_custom_call.1} parent=1 // pred_check_branch
      %45 = sbr.rel (0) target = $region41
    $region40: #{tpu_custom_call.1} parent=1 // pred_region
      %46 = dma.done [#allocation3], 2048
    $region41: #{tpu_custom_call.1} parent=1 // pred_fallthru
      _
    %v48 = vlaneseq
    %v49 = vand.u32 %v48, 127
    %vm50 = vcmp.lt.s32.totalorder %v49, 32
    %v51 = vsel %vm50, 1, 0
    %v52 = vcvt.s32.f32 %v51
    %v53 = vld [vmem:[%s0] sm:$0xff]
    %v54 = vpack.c.bf16 %v53, %v53
    %v55 = vld [vmem:[%s1] sm:$0xf]
    %v56 = vld [vmem:[%s1 + $0x4] sm:$0xf]
    %v57 = vld [vmem:[%s1 + $0x8] sm:$0xf]
    %v58 = vld [vmem:[%s1 + $0xc] sm:$0xf]
    %v59 = vld [vmem:[%s1 + $0x10] sm:$0xf]
    %v60 = vld [vmem:[%s1 + $0x14] sm:$0x3]
    %v61 = vld [vmem:[%s2] sm:$0x1]
    %v63 = vlaneseq
    %v64 = vshrl.u32 %v63, 7
    %v65 = vsub.s32 0, %v64
    %v66 = vrot.slane %v61, %v65
    %v74 = vunpack.c.l.b16 %v55
    %v75 = vunpack.c.l.b16 %v56
    %v76 = vunpack.c.l.b16 %v57
    %v77 = vunpack.c.l.b16 %v58
    %v78 = vunpack.c.l.b16 %v59
    %v79 = vunpack.c.l.b16 %v60
    %v80 = vpack.c.b16 %v75, %v74
    %v81 = vpack.c.b16 %v77, %v76
    %v82 = vpack.c.b16 %v79, %v78
    %vm85 = vcmask 359424
    %v87 = vsel %vm85, %v54, 0
    %vm89 = vcmask 1045504
    %v91 = vsel %vm89, %v82, 0
    %93 = vmatprep.subr.bf16.mxu0 0
    %94 = vmatpush1.bf16.msra.mxu0 %v80
    %95 = vmatprep.subr.bf16.mxu0 0
    %96 = vmatpush1.bf16.msra.mxu0 %v81
    %97 = vmatprep.subr.bf16.mxu0 0
    %98 = vmatpush1.bf16.msra.mxu0 %v91
    %99 = vmatprep.subr.bf16.mxu0 0
    %100 = vmatpush1.bf16.msra.mxu0 0
    %101 = vmatprep.subr.bf16.mxu0 0
    %102 = vmatpush1.bf16.msra.mxu0 0
    %103 = vmatprep.subr.bf16.mxu0 0
    %104 = vmatpush1.bf16.msra.mxu0 0
    %105 = vmatprep.subr.bf16.mxu0 0
    %106 = vmatpush1.bf16.msra.mxu0 0
    %107 = vmatprep.subr.bf16.mxu0 0
    %108 = vmatpush1.bf16.msra.mxu0 0
    %109 = vmatprep.subr.bf16.mxu0 0
    %110 = vmatpush1.bf16.msra.mxu0 0
    %111 = vmatprep.subr.bf16.mxu0 0
    %112 = vmatpush1.bf16.msra.mxu0 0
    %113 = vmatprep.subr.bf16.mxu0 0
    %114 = vmatpush1.bf16.msra.mxu0 0
    %115 = vmatprep.subr.bf16.mxu0 0
    %116 = vmatpush1.bf16.msra.mxu0 0
    %117 = vmatprep.subr.bf16.mxu0 0
    %118 = vmatpush1.bf16.msra.mxu0 0
    %119 = vmatprep.subr.bf16.mxu0 0
    %120 = vmatpush1.bf16.msra.mxu0 0
    %121 = vmatprep.subr.bf16.mxu0 0
    %122 = vmatpush1.bf16.msra.mxu0 0
    %123 = vmatprep.subr.bf16.mxu0 0
    %124 = vmatpush1.bf16.msra.mxu0 0
    %125 = vmatprep.mubr.bf16.mxu0 0
    %126 = vmatmul.mubr.bf16.gmra.mrb[0].mxu0 %v87
    %v127 = vpop.f32.mrb[0].mxu0
    %v128 = vadd.f32 %v66, %v127
    %v129 = vpop.f32.mrb[0].mxu0
    %v130 = vpop.f32.mrb[0].mxu0
    %v131 = vpop.f32.mrb[0].mxu0
    %132 = vdwg.mxu0
    %v133 = vld [vmem:[%s3] sm:$0x1]
    %v134 = vld [vmem:[%s4] sm:$0x1]
    %v135 = vld [vmem:[#allocation2] sm:$0xf]
    %v136 = vld [vmem:[#allocation2 + $0x4] sm:$0xf]
    %v137 = vld [vmem:[#allocation2 + $0x8] sm:$0xf]
    %v138 = vld [vmem:[#allocation2 + $0xc] sm:$0xf]
    %v139 = vld [vmem:[#allocation2 + $0x10] sm:$0xf]
    %v140 = vld [vmem:[#allocation2 + $0x14] sm:$0xf]
    %v141 = vld [vmem:[#allocation2 + $0x18] sm:$0xf]
    %v142 = vld [vmem:[#allocation2 + $0x1c] sm:$0xf]
    %v143 = vld [vmem:[#allocation2 + $0x20] sm:$0xf]
    %v144 = vld [vmem:[#allocation2 + $0x24] sm:$0xf]
    %v145 = vld [vmem:[#allocation2 + $0x28] sm:$0xf]
    %v146 = vld [vmem:[#allocation2 + $0x2c] sm:$0xf]
    %v147 = vld [vmem:[#allocation2 + $0x30] sm:$0xf]
    %v148 = vld [vmem:[#allocation2 + $0x34] sm:$0xf]
    %v149 = vld [vmem:[#allocation2 + $0x38] sm:$0xf]
    %v150 = vld [vmem:[#allocation2 + $0x3c] sm:$0xf]
    %v151 = vld [vmem:[%s6] sm:$0x1]
    %152 = vadd.xlane.f32.xlu0 %v128
    %v153 = vpop.xlane.xlu0 %152
    %v154 = vmul.f32 %v153, 0.03125
    %v155 = vsub.f32 %v128, %v154
    %v156 = vmul.f32 %v155, %v52
    %v157 = vmul.f32 %v156, %v156
    %158 = vadd.xlane.f32.xlu0 %v157
    %v159 = vpop.xlane.xlu0 %158
    %v160 = vmul.f32 %v159, 0.03125
    %v161 = vadd.f32 %v160, 1e-05
    %v162 = vrsqrt.pop %v161
    %v163 = vmul.f32 %v156, %v162
    %v165 = vlaneseq
    %v166 = vshrl.u32 %v165, 7
    %v167 = vsub.s32 0, %v166
    %v168 = vrot.slane %v133, %v167
    %v170 = vmul.f32 %v163, %v168
    %v172 = vlaneseq
    %v173 = vshrl.u32 %v172, 7
    %v174 = vsub.s32 0, %v173
    %v175 = vrot.slane %v134, %v174
    %v177 = vadd.f32 %v170, %v175
    %v178 = vmul.f32 %v177, 0.5
    %v179 = vtanh.pop %v178
    %v180 = vmul.f32 %v179, 0.5
    %v181 = vadd.f32 %v180, 0.5
    %v182 = vmul.f32 %v177, %v181
    %v183 = vpack.c.bf16 %v182, %v182
    %v185 = vlaneseq
    %v186 = vshrl.u32 %v185, 7
    %v187 = vsub.s32 0, %v186
    %v188 = vrot.slane %v151, %v187
    %v206 = vunpack.c.l.b16 %v135
    %v207 = vunpack.c.l.b16 %v136
    %v208 = vunpack.c.l.b16 %v137
    %v209 = vunpack.c.l.b16 %v138
    %v210 = vunpack.c.l.b16 %v139
    %v211 = vunpack.c.l.b16 %v140
    %v212 = vunpack.c.l.b16 %v141
    %v213 = vunpack.c.l.b16 %v142
    %v214 = vunpack.c.l.b16 %v143
    %v215 = vunpack.c.l.b16 %v144
    %v216 = vunpack.c.l.b16 %v145
    %v217 = vunpack.c.l.b16 %v146
    %v218 = vunpack.c.l.b16 %v147
    %v219 = vunpack.c.l.b16 %v148
    %v220 = vunpack.c.l.b16 %v149
    %v221 = vunpack.c.l.b16 %v150
    %v222 = vpack.c.b16 %v207, %v206
    %v223 = vpack.c.b16 %v209, %v208
    %v224 = vpack.c.b16 %v211, %v210
    %v225 = vpack.c.b16 %v213, %v212
    %v226 = vpack.c.b16 %v215, %v214
    %v227 = vpack.c.b16 %v217, %v216
    %v228 = vpack.c.b16 %v219, %v218
    %v229 = vpack.c.b16 %v221, %v220
    %238 = vmatprep.subr.bf16.mxu0 0
    %239 = vmatpush1.bf16.msra.mxu0 %v222
    %240 = vmatprep.subr.bf16.mxu0 0
    %241 = vmatpush1.bf16.msra.mxu0 %v223
    %242 = vmatprep.subr.bf16.mxu0 0
    %243 = vmatpush1.bf16.msra.mxu0 %v224
    %244 = vmatprep.subr.bf16.mxu0 0
    %245 = vmatpush1.bf16.msra.mxu0 %v225
    %246 = vmatprep.subr.bf16.mxu0 0
    %247 = vmatpush1.bf16.msra.mxu0 %v226
    %248 = vmatprep.subr.bf16.mxu0 0
    %249 = vmatpush1.bf16.msra.mxu0 %v227
    %250 = vmatprep.subr.bf16.mxu0 0
    %251 = vmatpush1.bf16.msra.mxu0 %v228
    %252 = vmatprep.subr.bf16.mxu0 0
    %253 = vmatpush1.bf16.msra.mxu0 %v229
    %254 = vmatprep.subr.bf16.mxu0 0
    %255 = vmatpush1.bf16.msra.mxu0 0
    %256 = vmatprep.subr.bf16.mxu0 0
    %257 = vmatpush1.bf16.msra.mxu0 0
    %258 = vmatprep.subr.bf16.mxu0 0
    %259 = vmatpush1.bf16.msra.mxu0 0
    %260 = vmatprep.subr.bf16.mxu0 0
    %261 = vmatpush1.bf16.msra.mxu0 0
    %262 = vmatprep.subr.bf16.mxu0 0
    %263 = vmatpush1.bf16.msra.mxu0 0
    %264 = vmatprep.subr.bf16.mxu0 0
    %265 = vmatpush1.bf16.msra.mxu0 0
    %266 = vmatprep.subr.bf16.mxu0 0
    %267 = vmatpush1.bf16.msra.mxu0 0
    %268 = vmatprep.subr.bf16.mxu0 0
    %269 = vmatpush1.bf16.msra.mxu0 0
    %270 = vmatprep.mubr.bf16.mxu0 0
    %271 = vmatmul.mubr.bf16.gmra.mrb[0].mxu0 %v183
    %v272 = vpop.f32.mrb[0].mxu0
    %v273 = vadd.f32 %v188, %v272
    %v274 = vpop.f32.mrb[0].mxu0
    %v275 = vpop.f32.mrb[0].mxu0
    %v276 = vpop.f32.mrb[0].mxu0
    %277 = vdwg.mxu0
    %v278 = vadd.f32 %v128, %v273
    %s279 = scalar_lea.vmem %s3, 1
    %v280 = vld [vmem:[%s279] sm:$0x1]
    %s281 = scalar_lea.vmem %s4, 1
    %v282 = vld [vmem:[%s281] sm:$0x1]
    %s283 = scalar_lea.vmem [#allocation2], 64
    %v284 = vld [vmem:[%s283] sm:$0xf]
    %v285 = vld [vmem:[%s283 + $0x4] sm:$0xf]
    %v286 = vld [vmem:[%s283 + $0x8] sm:$0xf]
    %v287 = vld [vmem:[%s283 + $0xc] sm:$0xf]
    %v288 = vld [vmem:[%s283 + $0x10] sm:$0xf]
    %v289 = vld [vmem:[%s283 + $0x14] sm:$0xf]
    %v290 = vld [vmem:[%s283 + $0x18] sm:$0xf]
    %v291 = vld [vmem:[%s283 + $0x1c] sm:$0xf]
    %v292 = vld [vmem:[%s283 + $0x20] sm:$0xf]
    %v293 = vld [vmem:[%s283 + $0x24] sm:$0xf]
    %v294 = vld [vmem:[%s283 + $0x28] sm:$0xf]
    %v295 = vld [vmem:[%s283 + $0x2c] sm:$0xf]
    %v296 = vld [vmem:[%s283 + $0x30] sm:$0xf]
    %v297 = vld [vmem:[%s283 + $0x34] sm:$0xf]
    %v298 = vld [vmem:[%s283 + $0x38] sm:$0xf]
    %v299 = vld [vmem:[%s283 + $0x3c] sm:$0xf]
    %s300 = scalar_lea.vmem %s6, 1
    %v301 = vld [vmem:[%s300] sm:$0x1]
    %302 = vadd.xlane.f32.xlu0 %v278
    %v303 = vpop.xlane.xlu0 %302
    %v304 = vmul.f32 %v303, 0.03125
    %v305 = vsub.f32 %v278, %v304
    %v306 = vmul.f32 %v305, %v52
    %v307 = vmul.f32 %v306, %v306
    %308 = vadd.xlane.f32.xlu0 %v307
    %v309 = vpop.xlane.xlu0 %308
    %v310 = vmul.f32 %v309, 0.03125
    %v311 = vadd.f32 %v310, 1e-05
    %v312 = vrsqrt.pop %v311
    %v313 = vmul.f32 %v306, %v312
    %v315 = vlaneseq
    %v316 = vshrl.u32 %v315, 7
    %v317 = vsub.s32 0, %v316
    %v318 = vrot.slane %v280, %v317
    %v320 = vmul.f32 %v313, %v318
    %v322 = vlaneseq
    %v323 = vshrl.u32 %v322, 7
    %v324 = vsub.s32 0, %v323
    %v325 = vrot.slane %v282, %v324
    %v327 = vadd.f32 %v320, %v325
    %v328 = vmul.f32 %v327, 0.5
    %v329 = vtanh.pop %v328
    %v330 = vmul.f32 %v329, 0.5
    %v331 = vadd.f32 %v330, 0.5
    %v332 = vmul.f32 %v327, %v331
    %v333 = vpack.c.bf16 %v332, %v332
    %v335 = vlaneseq
    %v336 = vshrl.u32 %v335, 7
    %v337 = vsub.s32 0, %v336
    %v338 = vrot.slane %v301, %v337
    %v356 = vunpack.c.l.b16 %v284
    %v357 = vunpack.c.l.b16 %v285
    %v358 = vunpack.c.l.b16 %v286
    %v359 = vunpack.c.l.b16 %v287
    %v360 = vunpack.c.l.b16 %v288
    %v361 = vunpack.c.l.b16 %v289
    %v362 = vunpack.c.l.b16 %v290
    %v363 = vunpack.c.l.b16 %v291
    %v364 = vunpack.c.l.b16 %v292
    %v365 = vunpack.c.l.b16 %v293
    %v366 = vunpack.c.l.b16 %v294
    %v367 = vunpack.c.l.b16 %v295
    %v368 = vunpack.c.l.b16 %v296
    %v369 = vunpack.c.l.b16 %v297
    %v370 = vunpack.c.l.b16 %v298
    %v371 = vunpack.c.l.b16 %v299
    %v372 = vpack.c.b16 %v357, %v356
    %v373 = vpack.c.b16 %v359, %v358
    %v374 = vpack.c.b16 %v361, %v360
    %v375 = vpack.c.b16 %v363, %v362
    %v376 = vpack.c.b16 %v365, %v364
    %v377 = vpack.c.b16 %v367, %v366
    %v378 = vpack.c.b16 %v369, %v368
    %v379 = vpack.c.b16 %v371, %v370
    %388 = vmatprep.subr.bf16.mxu0 0
    %389 = vmatpush1.bf16.msra.mxu0 %v372
    %390 = vmatprep.subr.bf16.mxu0 0
    %391 = vmatpush1.bf16.msra.mxu0 %v373
    %392 = vmatprep.subr.bf16.mxu0 0
    %393 = vmatpush1.bf16.msra.mxu0 %v374
    %394 = vmatprep.subr.bf16.mxu0 0
    %395 = vmatpush1.bf16.msra.mxu0 %v375
    %396 = vmatprep.subr.bf16.mxu0 0
    %397 = vmatpush1.bf16.msra.mxu0 %v376
    %398 = vmatprep.subr.bf16.mxu0 0
    %399 = vmatpush1.bf16.msra.mxu0 %v377
    %400 = vmatprep.subr.bf16.mxu0 0
    %401 = vmatpush1.bf16.msra.mxu0 %v378
    %402 = vmatprep.subr.bf16.mxu0 0
    %403 = vmatpush1.bf16.msra.mxu0 %v379
    %404 = vmatprep.subr.bf16.mxu0 0
    %405 = vmatpush1.bf16.msra.mxu0 0
    %406 = vmatprep.subr.bf16.mxu0 0
    %407 = vmatpush1.bf16.msra.mxu0 0
    %408 = vmatprep.subr.bf16.mxu0 0
    %409 = vmatpush1.bf16.msra.mxu0 0
    %410 = vmatprep.subr.bf16.mxu0 0
    %411 = vmatpush1.bf16.msra.mxu0 0
    %412 = vmatprep.subr.bf16.mxu0 0
    %413 = vmatpush1.bf16.msra.mxu0 0
    %414 = vmatprep.subr.bf16.mxu0 0
    %415 = vmatpush1.bf16.msra.mxu0 0
    %416 = vmatprep.subr.bf16.mxu0 0
    %417 = vmatpush1.bf16.msra.mxu0 0
    %418 = vmatprep.subr.bf16.mxu0 0
    %419 = vmatpush1.bf16.msra.mxu0 0
    %420 = vmatprep.mubr.bf16.mxu0 0
    %421 = vmatmul.mubr.bf16.gmra.mrb[0].mxu0 %v333
    %v422 = vpop.f32.mrb[0].mxu0
    %v423 = vadd.f32 %v338, %v422
    %v424 = vpop.f32.mrb[0].mxu0
    %v425 = vpop.f32.mrb[0].mxu0
    %v426 = vpop.f32.mrb[0].mxu0
    %427 = vdwg.mxu0
    %v428 = vadd.f32 %v278, %v423
    %v429 = vpack.c.bf16 %v428, %v428
    %v430 = vld [vmem:[%s7] sm:$0xf]
    %v431 = vld [vmem:[%s7 + $0x4] sm:$0xf]
    %v432 = vld [vmem:[%s7 + $0x8] sm:$0xf]
    %v433 = vld [vmem:[%s7 + $0xc] sm:$0xf]
    %v434 = vld [vmem:[%s7 + $0x10] sm:$0xf]
    %v435 = vld [vmem:[%s7 + $0x14] sm:$0xf]
    %v436 = vld [vmem:[%s7 + $0x18] sm:$0xf]
    %v437 = vld [vmem:[%s7 + $0x1c] sm:$0xf]
    %v438 = vld [vmem:[%s7 + $0x20] sm:$0xf]
    %v439 = vld [vmem:[%s7 + $0x24] sm:$0xf]
    %v440 = vld [vmem:[%s7 + $0x28] sm:$0xf]
    %v441 = vld [vmem:[%s7 + $0x2c] sm:$0xf]
    %v442 = vld [vmem:[%s7 + $0x30] sm:$0xf]
    %v443 = vld [vmem:[%s7 + $0x34] sm:$0xf]
    %v444 = vld [vmem:[%s7 + $0x38] sm:$0xf]
    %v445 = vld [vmem:[%s7 + $0x3c] sm:$0xf]
    %v446 = vld [vmem:[%s8] sm:$0x1]
    %v448 = vlaneseq
    %v449 = vshrl.u32 %v448, 7
    %v450 = vsub.s32 0, %v449
    %v451 = vrot.slane %v446, %v450
    %v469 = vunpack.c.l.b16 %v430
    %v470 = vunpack.c.l.b16 %v431
    %v471 = vunpack.c.l.b16 %v432
    %v472 = vunpack.c.l.b16 %v433
    %v473 = vunpack.c.l.b16 %v434
    %v474 = vunpack.c.l.b16 %v435
    %v475 = vunpack.c.l.b16 %v436
    %v476 = vunpack.c.l.b16 %v437
    %v477 = vunpack.c.l.b16 %v438
    %v478 = vunpack.c.l.b16 %v439
    %v479 = vunpack.c.l.b16 %v440
    %v480 = vunpack.c.l.b16 %v441
    %v481 = vunpack.c.l.b16 %v442
    %v482 = vunpack.c.l.b16 %v443
    %v483 = vunpack.c.l.b16 %v444
    %v484 = vunpack.c.l.b16 %v445
    %v485 = vpack.c.b16 %v470, %v469
    %v486 = vpack.c.b16 %v472, %v471
    %v487 = vpack.c.b16 %v474, %v473
    %v488 = vpack.c.b16 %v476, %v475
    %v489 = vpack.c.b16 %v478, %v477
    %v490 = vpack.c.b16 %v480, %v479
    %v491 = vpack.c.b16 %v482, %v481
    %v492 = vpack.c.b16 %v484, %v483
    %501 = vmatprep.subr.bf16.mxu0 0
    %502 = vmatpush1.bf16.msra.mxu0 %v485
    %503 = vmatprep.subr.bf16.mxu0 0
    %504 = vmatpush1.bf16.msra.mxu0 %v486
    %505 = vmatprep.subr.bf16.mxu0 0
    %506 = vmatpush1.bf16.msra.mxu0 %v487
    %507 = vmatprep.subr.bf16.mxu0 0
    %508 = vmatpush1.bf16.msra.mxu0 %v488
    %509 = vmatprep.subr.bf16.mxu0 0
    %510 = vmatpush1.bf16.msra.mxu0 %v489
    %511 = vmatprep.subr.bf16.mxu0 0
    %512 = vmatpush1.bf16.msra.mxu0 %v490
    %513 = vmatprep.subr.bf16.mxu0 0
    %514 = vmatpush1.bf16.msra.mxu0 %v491
    %515 = vmatprep.subr.bf16.mxu0 0
    %516 = vmatpush1.bf16.msra.mxu0 %v492
    %517 = vmatprep.subr.bf16.mxu0 0
    %518 = vmatpush1.bf16.msra.mxu0 0
    %519 = vmatprep.subr.bf16.mxu0 0
    %520 = vmatpush1.bf16.msra.mxu0 0
    %521 = vmatprep.subr.bf16.mxu0 0
    %522 = vmatpush1.bf16.msra.mxu0 0
    %523 = vmatprep.subr.bf16.mxu0 0
    %524 = vmatpush1.bf16.msra.mxu0 0
    %525 = vmatprep.subr.bf16.mxu0 0
    %526 = vmatpush1.bf16.msra.mxu0 0
    %527 = vmatprep.subr.bf16.mxu0 0
    %528 = vmatpush1.bf16.msra.mxu0 0
    %529 = vmatprep.subr.bf16.mxu0 0
    %530 = vmatpush1.bf16.msra.mxu0 0
    %531 = vmatprep.subr.bf16.mxu0 0
    %532 = vmatpush1.bf16.msra.mxu0 0
    %533 = vmatprep.mubr.bf16.mxu0 0
    %534 = vmatmul.mubr.bf16.gmra.mrb[0].mxu0 %v429
    %v535 = vpop.f32.mrb[0].mxu0
    %v536 = vadd.f32 %v451, %v535
    %v537 = vpop.f32.mrb[0].mxu0
    %v538 = vpop.f32.mrb[0].mxu0
    %v539 = vpop.f32.mrb[0].mxu0
    %540 = vdwg.mxu0
    %vm541 = vcmask 48128
    %542 = vst.msk [vmem:[#allocation5] sm:$0xff] %vm541, %v536
    // Predicated region
    $region42: #{tpu_custom_call.1} parent=1 // pred_check
      _
    $region43: #{tpu_custom_call.1} parent=1 // pred_check_branch
      %544 = sbr.rel (0) target = $region45
    $region44: #{tpu_custom_call.1} parent=1 // pred_region
      %s546 = ssub.s32 128, 128
      %547 = vsyncadd [#allocation4], %s546
      %s549 = sshll.u32 [#allocation5], 4
      %s550 = int_to_ptr.vmem [resolvable:$true] %s549
      %552 = dma.vmem_to_hbm [thread:$0]  %s550, 128, %s9, [#allocation4]
    $region45: #{tpu_custom_call.1} parent=1 // pred_fallthru
      _
    // Predicated region
    $region46: #{tpu_custom_call.1} parent=1 // pred_check
      _
    $region47: #{tpu_custom_call.1} parent=1 // pred_check_branch
      %554 = sbr.rel (0) target = $region49
    $region48: #{tpu_custom_call.1} parent=1 // pred_region
      %555 = dma.done [#allocation4], 128
    $region49: #{tpu_custom_call.1} parent=1 // pred_fallthru
      _
    %556 = vsyncpa [#allocation3], 1
    %557 = vsyncpa [#allocation4], 1

</llo_original>
